<compile_context>
chip_gen: v7x
topology: tpu7x:2x2x1
jax: 0.10.0
libtpu: 0.0.40
codegen_flags: <defaults>
</compile_context>

<pallas_src>
import math
import numpy as np
import jax
import jax.numpy as jnp
from jax import lax
from jax.experimental import pallas as pl
from jax.experimental.pallas import tpu as pltpu

# --- configuration (model1(n_qubit=4, n_layer=2)) ---
NQ = 4              # qubits (nq = 4 in the reference file)
NL = 2              # circuit layers
DIM = 2 ** NQ       # 16 real amplitudes
PAD = 128           # lane-padded statevector width (one vreg row)


def _model1_kernel(x_ref, theta_ref, out_ref):
    f32 = jnp.float32
    lane = lax.broadcasted_iota(jnp.int32, (1, PAD), 1)

    # Per-qubit constant lane-bit tests and RY signs, hoisted once.
    bit = [((lane >> q) & 1) == 1 for q in range(NQ)]                 # bool (1,PAD)
    sign = [jnp.where(bit[q], f32(1.0), f32(-1.0)) for q in range(NQ)]

    # Gate half-angles: RY(2*x_i) -> half angle x_i ; RY(theta_k) -> theta_k/2.
    cos_x, sin_x = jnp.cos(x_ref[...]), jnp.sin(x_ref[...])           # (1, NQ)
    half_t = theta_ref[...] * 0.5
    cos_t, sin_t = jnp.cos(half_t), jnp.sin(half_t)                   # (1, NQ*NL)

    # |0...0> in lane 0; lanes >= DIM are don't-care padding (they never feed
    # lanes < DIM because XOR partners of lanes 0..15 stay within 0..15).
    state = jnp.where(lane == 0, f32(1.0), f32(0.0))

    def partner(st, q):
        # st[b ^ (1 << q)] : two XLU lane rotations + one vselect (no MXU).
        m = 1 << q
        up = pltpu.roll(st, m, 1)          # out[i] = st[i - m]  (bit q set)
        down = pltpu.roll(st, PAD - m, 1)  # out[i] = st[i + m]  (bit q clear)
        return jnp.where(bit[q], up, down)

    def ry(st, q, c, s):
        # c, s are (1,1) scalars (broadcast along lanes).
        return c * st + (s * sign[q]) * partner(st, q)

    def cx(st, ctrl, tgt):
        return jnp.where(bit[ctrl], partner(st, tgt), st)

    # Encoding layer: RY(2*x_q) on qubit q.
    for q in range(NQ):
        state = ry(state, q, cos_x[:, q:q + 1], sin_x[:, q:q + 1])
    # Variational layers: RY(theta) per qubit, then CX chain.
    for l in range(NL):
        for j in range(NQ):
            k = l * NQ + j
            state = ry(state, j, cos_t[:, k:k + 1], sin_t[:, k:k + 1])
        for j in range(NQ - 1):
            state = cx(state, j, j + 1)

    amp0 = state[:, 0:1]
    out_ref[...] = amp0 * amp0            # P(|00..0>)


def model1_forward(x, alfa):
    args = (jnp.asarray(x, jnp.float32).reshape(1, NQ),
            jnp.asarray(alfa, jnp.float32).reshape(1, NQ * NL))
    return pl.pallas_call(
        _model1_kernel,
        out_shape=jax.ShapeDtypeStruct((1, 1), jnp.float32),
        in_specs=[pl.BlockSpec(memory_space=pltpu.MemorySpace.VMEM)] * len(args),
        out_specs=pl.BlockSpec(memory_space=pltpu.MemorySpace.VMEM),
    )(*args)


# ------------------------- plain numpy reference -------------------------
def reference_forward(x, theta):
    state = np.zeros(DIM, np.float64)
    state[0] = 1.0

    def ry(st, q, half):
        c, s = np.cos(half), np.sin(half)
        new = np.empty_like(st)
        for b in range(DIM):
            p = b ^ (1 << q)
            if (b >> q) & 1:
                new[b] = s * st[p] + c * st[b]
            else:
                new[b] = c * st[b] - s * st[p]
        return new

    def cxg(st, ctrl, tgt):
        new = st.copy()
        for b in range(DIM):
            if (b >> ctrl) & 1:
                new[b] = st[b ^ (1 << tgt)]
        return new

    for q in range(NQ):
        state = ry(state, q, x[q])
    for l in range(NL):
        for j in range(NQ):
            state = ry(state, j, theta[l * NQ + j] / 2.0)
        for j in range(NQ - 1):
            state = cxg(state, j, j + 1)
    return np.array([[state[0] ** 2]], np.float32)


if __name__ == "__main__":
    key = jax.random.PRNGKey(0)
    kx, ka = jax.random.split(key)
    x = jax.random.uniform(kx, (NQ,), jnp.float32, -math.pi, math.pi)
    alfa = jax.random.uniform(ka, (NQ * NL,), jnp.float32, -math.pi, math.pi)

    out = jax.block_until_ready(model1_forward(x, alfa))
    assert out.shape == (1, 1)

    ref = reference_forward(np.asarray(x, np.float64), np.asarray(alfa, np.float64))
    assert np.allclose(np.asarray(out), ref, atol=1e-4, rtol=1e-3), (np.asarray(out), ref)
    print("KERNEL_OK")
</pallas_src>

<mosaic_0001>
module attributes {stable_mosaic.version = 11 : i64} {
  func.func @_model1_kernel(%arg0: memref<1x4xf32, #tpu.memory_space<vmem>>, %arg1: memref<1x8xf32, #tpu.memory_space<vmem>>, %arg2: memref<1x1xf32, #tpu.memory_space<vmem>>) attributes {dimension_semantics = [], scalar_prefetch = 0 : i64, scratch_operands = 0 : i64, tpu.core_type = #tpu.core_type<tc>} {
    %0 = tpu.iota {dimensions = array<i32: 1>} : vector<1x128xi32>
    %c0_i32 = arith.constant 0 : i32
    %1 = vector.broadcast %c0_i32 : i32 to vector<1x128xi32>
    %2 = arith.shrsi %0, %1 : vector<1x128xi32>
    %c1_i32 = arith.constant 1 : i32
    %3 = vector.broadcast %c1_i32 : i32 to vector<1x128xi32>
    %4 = arith.andi %2, %3 : vector<1x128xi32>
    %c1_i32_0 = arith.constant 1 : i32
    %5 = vector.broadcast %c1_i32_0 : i32 to vector<1x128xi32>
    %6 = arith.cmpi eq, %4, %5 : vector<1x128xi32>
    %c1_i32_1 = arith.constant 1 : i32
    %7 = vector.broadcast %c1_i32_1 : i32 to vector<1x128xi32>
    %8 = arith.shrsi %0, %7 : vector<1x128xi32>
    %c1_i32_2 = arith.constant 1 : i32
    %9 = vector.broadcast %c1_i32_2 : i32 to vector<1x128xi32>
    %10 = arith.andi %8, %9 : vector<1x128xi32>
    %c1_i32_3 = arith.constant 1 : i32
    %11 = vector.broadcast %c1_i32_3 : i32 to vector<1x128xi32>
    %12 = arith.cmpi eq, %10, %11 : vector<1x128xi32>
    %c2_i32 = arith.constant 2 : i32
    %13 = vector.broadcast %c2_i32 : i32 to vector<1x128xi32>
    %14 = arith.shrsi %0, %13 : vector<1x128xi32>
    %c1_i32_4 = arith.constant 1 : i32
    %15 = vector.broadcast %c1_i32_4 : i32 to vector<1x128xi32>
    %16 = arith.andi %14, %15 : vector<1x128xi32>
    %c1_i32_5 = arith.constant 1 : i32
    %17 = vector.broadcast %c1_i32_5 : i32 to vector<1x128xi32>
    %18 = arith.cmpi eq, %16, %17 : vector<1x128xi32>
    %c3_i32 = arith.constant 3 : i32
    %19 = vector.broadcast %c3_i32 : i32 to vector<1x128xi32>
    %20 = arith.shrsi %0, %19 : vector<1x128xi32>
    %c1_i32_6 = arith.constant 1 : i32
    %21 = vector.broadcast %c1_i32_6 : i32 to vector<1x128xi32>
    %22 = arith.andi %20, %21 : vector<1x128xi32>
    %c1_i32_7 = arith.constant 1 : i32
    %23 = vector.broadcast %c1_i32_7 : i32 to vector<1x128xi32>
    %24 = arith.cmpi eq, %22, %23 : vector<1x128xi32>
    %cst = arith.constant 1.000000e+00 : f32
    %cst_8 = arith.constant -1.000000e+00 : f32
    %25 = vector.broadcast %cst : f32 to vector<1x128xf32>
    %26 = vector.broadcast %cst_8 : f32 to vector<1x128xf32>
    %27 = arith.select %6, %25, %26 : vector<1x128xi1>, vector<1x128xf32>
    %cst_9 = arith.constant 1.000000e+00 : f32
    %cst_10 = arith.constant -1.000000e+00 : f32
    %28 = vector.broadcast %cst_9 : f32 to vector<1x128xf32>
    %29 = vector.broadcast %cst_10 : f32 to vector<1x128xf32>
    %30 = arith.select %12, %28, %29 : vector<1x128xi1>, vector<1x128xf32>
    %cst_11 = arith.constant 1.000000e+00 : f32
    %cst_12 = arith.constant -1.000000e+00 : f32
    %31 = vector.broadcast %cst_11 : f32 to vector<1x128xf32>
    %32 = vector.broadcast %cst_12 : f32 to vector<1x128xf32>
    %33 = arith.select %18, %31, %32 : vector<1x128xi1>, vector<1x128xf32>
    %cst_13 = arith.constant 1.000000e+00 : f32
    %cst_14 = arith.constant -1.000000e+00 : f32
    %34 = vector.broadcast %cst_13 : f32 to vector<1x128xf32>
    %35 = vector.broadcast %cst_14 : f32 to vector<1x128xf32>
    %36 = arith.select %24, %34, %35 : vector<1x128xi1>, vector<1x128xf32>
    %c0 = arith.constant 0 : index
    %c0_15 = arith.constant 0 : index
    %37 = vector.load %arg0[%c0, %c0_15] : memref<1x4xf32, #tpu.memory_space<vmem>>, vector<1x4xf32>
    %38 = math.cos %37 : vector<1x4xf32>
    %c0_16 = arith.constant 0 : index
    %c0_17 = arith.constant 0 : index
    %39 = vector.load %arg0[%c0_16, %c0_17] : memref<1x4xf32, #tpu.memory_space<vmem>>, vector<1x4xf32>
    %40 = math.sin %39 : vector<1x4xf32>
    %c0_18 = arith.constant 0 : index
    %c0_19 = arith.constant 0 : index
    %41 = vector.load %arg1[%c0_18, %c0_19] : memref<1x8xf32, #tpu.memory_space<vmem>>, vector<1x8xf32>
    %cst_20 = arith.constant 5.000000e-01 : f32
    %42 = vector.broadcast %cst_20 : f32 to vector<1x8xf32>
    %43 = arith.mulf %41, %42 : vector<1x8xf32>
    %44 = math.cos %43 : vector<1x8xf32>
    %45 = math.sin %43 : vector<1x8xf32>
    %c0_i32_21 = arith.constant 0 : i32
    %46 = vector.broadcast %c0_i32_21 : i32 to vector<1x128xi32>
    %47 = arith.cmpi eq, %0, %46 : vector<1x128xi32>
    %cst_22 = arith.constant 1.000000e+00 : f32
    %cst_23 = arith.constant 0.000000e+00 : f32
    %48 = vector.broadcast %cst_22 : f32 to vector<1x128xf32>
    %49 = vector.broadcast %cst_23 : f32 to vector<1x128xf32>
    %50 = arith.select %47, %48, %49 : vector<1x128xi1>, vector<1x128xf32>
    %51 = vector.extract_strided_slice %38 {offsets = [0, 0], sizes = [1, 1], strides = [1, 1]} : vector<1x4xf32> to vector<1x1xf32>
    %52 = vector.extract_strided_slice %40 {offsets = [0, 0], sizes = [1, 1], strides = [1, 1]} : vector<1x4xf32> to vector<1x1xf32>
    %53 = vector.broadcast %51 : vector<1x1xf32> to vector<1x128xf32>
    %54 = arith.mulf %53, %50 : vector<1x128xf32>
    %55 = vector.broadcast %52 : vector<1x1xf32> to vector<1x128xf32>
    %56 = arith.mulf %55, %27 : vector<1x128xf32>
    %c1_i32_24 = arith.constant 1 : i32
    %57 = tpu.dynamic_rotate %50 by %c1_i32_24 dim 1 : vector<1x128xf32>, i32 -> vector<1x128xf32>
    %c127_i32 = arith.constant 127 : i32
    %58 = tpu.dynamic_rotate %50 by %c127_i32 dim 1 : vector<1x128xf32>, i32 -> vector<1x128xf32>
    %59 = arith.select %6, %57, %58 : vector<1x128xi1>, vector<1x128xf32>
    %60 = arith.mulf %56, %59 : vector<1x128xf32>
    %61 = arith.addf %54, %60 : vector<1x128xf32>
    %62 = vector.extract_strided_slice %38 {offsets = [0, 1], sizes = [1, 1], strides = [1, 1]} : vector<1x4xf32> to vector<1x1xf32>
    %63 = vector.extract_strided_slice %40 {offsets = [0, 1], sizes = [1, 1], strides = [1, 1]} : vector<1x4xf32> to vector<1x1xf32>
    %64 = vector.broadcast %62 : vector<1x1xf32> to vector<1x128xf32>
    %65 = arith.mulf %64, %61 : vector<1x128xf32>
    %66 = vector.broadcast %63 : vector<1x1xf32> to vector<1x128xf32>
    %67 = arith.mulf %66, %30 : vector<1x128xf32>
    %c2_i32_25 = arith.constant 2 : i32
    %68 = tpu.dynamic_rotate %61 by %c2_i32_25 dim 1 : vector<1x128xf32>, i32 -> vector<1x128xf32>
    %c126_i32 = arith.constant 126 : i32
    %69 = tpu.dynamic_rotate %61 by %c126_i32 dim 1 : vector<1x128xf32>, i32 -> vector<1x128xf32>
    %70 = arith.select %12, %68, %69 : vector<1x128xi1>, vector<1x128xf32>
    %71 = arith.mulf %67, %70 : vector<1x128xf32>
    %72 = arith.addf %65, %71 : vector<1x128xf32>
    %73 = vector.extract_strided_slice %38 {offsets = [0, 2], sizes = [1, 1], strides = [1, 1]} : vector<1x4xf32> to vector<1x1xf32>
    %74 = vector.extract_strided_slice %40 {offsets = [0, 2], sizes = [1, 1], strides = [1, 1]} : vector<1x4xf32> to vector<1x1xf32>
    %75 = vector.broadcast %73 : vector<1x1xf32> to vector<1x128xf32>
    %76 = arith.mulf %75, %72 : vector<1x128xf32>
    %77 = vector.broadcast %74 : vector<1x1xf32> to vector<1x128xf32>
    %78 = arith.mulf %77, %33 : vector<1x128xf32>
    %c4_i32 = arith.constant 4 : i32
    %79 = tpu.dynamic_rotate %72 by %c4_i32 dim 1 : vector<1x128xf32>, i32 -> vector<1x128xf32>
    %c124_i32 = arith.constant 124 : i32
    %80 = tpu.dynamic_rotate %72 by %c124_i32 dim 1 : vector<1x128xf32>, i32 -> vector<1x128xf32>
    %81 = arith.select %18, %79, %80 : vector<1x128xi1>, vector<1x128xf32>
    %82 = arith.mulf %78, %81 : vector<1x128xf32>
    %83 = arith.addf %76, %82 : vector<1x128xf32>
    %84 = vector.extract_strided_slice %38 {offsets = [0, 3], sizes = [1, 1], strides = [1, 1]} : vector<1x4xf32> to vector<1x1xf32>
    %85 = vector.extract_strided_slice %40 {offsets = [0, 3], sizes = [1, 1], strides = [1, 1]} : vector<1x4xf32> to vector<1x1xf32>
    %86 = vector.broadcast %84 : vector<1x1xf32> to vector<1x128xf32>
    %87 = arith.mulf %86, %83 : vector<1x128xf32>
    %88 = vector.broadcast %85 : vector<1x1xf32> to vector<1x128xf32>
    %89 = arith.mulf %88, %36 : vector<1x128xf32>
    %c8_i32 = arith.constant 8 : i32
    %90 = tpu.dynamic_rotate %83 by %c8_i32 dim 1 : vector<1x128xf32>, i32 -> vector<1x128xf32>
    %c120_i32 = arith.constant 120 : i32
    %91 = tpu.dynamic_rotate %83 by %c120_i32 dim 1 : vector<1x128xf32>, i32 -> vector<1x128xf32>
    %92 = arith.select %24, %90, %91 : vector<1x128xi1>, vector<1x128xf32>
    %93 = arith.mulf %89, %92 : vector<1x128xf32>
    %94 = arith.addf %87, %93 : vector<1x128xf32>
    %95 = vector.extract_strided_slice %44 {offsets = [0, 0], sizes = [1, 1], strides = [1, 1]} : vector<1x8xf32> to vector<1x1xf32>
    %96 = vector.extract_strided_slice %45 {offsets = [0, 0], sizes = [1, 1], strides = [1, 1]} : vector<1x8xf32> to vector<1x1xf32>
    %97 = vector.broadcast %95 : vector<1x1xf32> to vector<1x128xf32>
    %98 = arith.mulf %97, %94 : vector<1x128xf32>
    %99 = vector.broadcast %96 : vector<1x1xf32> to vector<1x128xf32>
    %100 = arith.mulf %99, %27 : vector<1x128xf32>
    %c1_i32_26 = arith.constant 1 : i32
    %101 = tpu.dynamic_rotate %94 by %c1_i32_26 dim 1 : vector<1x128xf32>, i32 -> vector<1x128xf32>
    %c127_i32_27 = arith.constant 127 : i32
    %102 = tpu.dynamic_rotate %94 by %c127_i32_27 dim 1 : vector<1x128xf32>, i32 -> vector<1x128xf32>
    %103 = arith.select %6, %101, %102 : vector<1x128xi1>, vector<1x128xf32>
    %104 = arith.mulf %100, %103 : vector<1x128xf32>
    %105 = arith.addf %98, %104 : vector<1x128xf32>
    %106 = vector.extract_strided_slice %44 {offsets = [0, 1], sizes = [1, 1], strides = [1, 1]} : vector<1x8xf32> to vector<1x1xf32>
    %107 = vector.extract_strided_slice %45 {offsets = [0, 1], sizes = [1, 1], strides = [1, 1]} : vector<1x8xf32> to vector<1x1xf32>
    %108 = vector.broadcast %106 : vector<1x1xf32> to vector<1x128xf32>
    %109 = arith.mulf %108, %105 : vector<1x128xf32>
    %110 = vector.broadcast %107 : vector<1x1xf32> to vector<1x128xf32>
    %111 = arith.mulf %110, %30 : vector<1x128xf32>
    %c2_i32_28 = arith.constant 2 : i32
    %112 = tpu.dynamic_rotate %105 by %c2_i32_28 dim 1 : vector<1x128xf32>, i32 -> vector<1x128xf32>
    %c126_i32_29 = arith.constant 126 : i32
    %113 = tpu.dynamic_rotate %105 by %c126_i32_29 dim 1 : vector<1x128xf32>, i32 -> vector<1x128xf32>
    %114 = arith.select %12, %112, %113 : vector<1x128xi1>, vector<1x128xf32>
    %115 = arith.mulf %111, %114 : vector<1x128xf32>
    %116 = arith.addf %109, %115 : vector<1x128xf32>
    %117 = vector.extract_strided_slice %44 {offsets = [0, 2], sizes = [1, 1], strides = [1, 1]} : vector<1x8xf32> to vector<1x1xf32>
    %118 = vector.extract_strided_slice %45 {offsets = [0, 2], sizes = [1, 1], strides = [1, 1]} : vector<1x8xf32> to vector<1x1xf32>
    %119 = vector.broadcast %117 : vector<1x1xf32> to vector<1x128xf32>
    %120 = arith.mulf %119, %116 : vector<1x128xf32>
    %121 = vector.broadcast %118 : vector<1x1xf32> to vector<1x128xf32>
    %122 = arith.mulf %121, %33 : vector<1x128xf32>
    %c4_i32_30 = arith.constant 4 : i32
    %123 = tpu.dynamic_rotate %116 by %c4_i32_30 dim 1 : vector<1x128xf32>, i32 -> vector<1x128xf32>
    %c124_i32_31 = arith.constant 124 : i32
    %124 = tpu.dynamic_rotate %116 by %c124_i32_31 dim 1 : vector<1x128xf32>, i32 -> vector<1x128xf32>
    %125 = arith.select %18, %123, %124 : vector<1x128xi1>, vector<1x128xf32>
    %126 = arith.mulf %122, %125 : vector<1x128xf32>
    %127 = arith.addf %120, %126 : vector<1x128xf32>
    %128 = vector.extract_strided_slice %44 {offsets = [0, 3], sizes = [1, 1], strides = [1, 1]} : vector<1x8xf32> to vector<1x1xf32>
    %129 = vector.extract_strided_slice %45 {offsets = [0, 3], sizes = [1, 1], strides = [1, 1]} : vector<1x8xf32> to vector<1x1xf32>
    %130 = vector.broadcast %128 : vector<1x1xf32> to vector<1x128xf32>
    %131 = arith.mulf %130, %127 : vector<1x128xf32>
    %132 = vector.broadcast %129 : vector<1x1xf32> to vector<1x128xf32>
    %133 = arith.mulf %132, %36 : vector<1x128xf32>
    %c8_i32_32 = arith.constant 8 : i32
    %134 = tpu.dynamic_rotate %127 by %c8_i32_32 dim 1 : vector<1x128xf32>, i32 -> vector<1x128xf32>
    %c120_i32_33 = arith.constant 120 : i32
    %135 = tpu.dynamic_rotate %127 by %c120_i32_33 dim 1 : vector<1x128xf32>, i32 -> vector<1x128xf32>
    %136 = arith.select %24, %134, %135 : vector<1x128xi1>, vector<1x128xf32>
    %137 = arith.mulf %133, %136 : vector<1x128xf32>
    %138 = arith.addf %131, %137 : vector<1x128xf32>
    %c2_i32_34 = arith.constant 2 : i32
    %139 = tpu.dynamic_rotate %138 by %c2_i32_34 dim 1 : vector<1x128xf32>, i32 -> vector<1x128xf32>
    %c126_i32_35 = arith.constant 126 : i32
    %140 = tpu.dynamic_rotate %138 by %c126_i32_35 dim 1 : vector<1x128xf32>, i32 -> vector<1x128xf32>
    %141 = arith.select %12, %139, %140 : vector<1x128xi1>, vector<1x128xf32>
    %142 = arith.select %6, %141, %138 : vector<1x128xi1>, vector<1x128xf32>
    %c4_i32_36 = arith.constant 4 : i32
    %143 = tpu.dynamic_rotate %142 by %c4_i32_36 dim 1 : vector<1x128xf32>, i32 -> vector<1x128xf32>
    %c124_i32_37 = arith.constant 124 : i32
    %144 = tpu.dynamic_rotate %142 by %c124_i32_37 dim 1 : vector<1x128xf32>, i32 -> vector<1x128xf32>
    %145 = arith.select %18, %143, %144 : vector<1x128xi1>, vector<1x128xf32>
    %146 = arith.select %12, %145, %142 : vector<1x128xi1>, vector<1x128xf32>
    %c8_i32_38 = arith.constant 8 : i32
    %147 = tpu.dynamic_rotate %146 by %c8_i32_38 dim 1 : vector<1x128xf32>, i32 -> vector<1x128xf32>
    %c120_i32_39 = arith.constant 120 : i32
    %148 = tpu.dynamic_rotate %146 by %c120_i32_39 dim 1 : vector<1x128xf32>, i32 -> vector<1x128xf32>
    %149 = arith.select %24, %147, %148 : vector<1x128xi1>, vector<1x128xf32>
    %150 = arith.select %18, %149, %146 : vector<1x128xi1>, vector<1x128xf32>
    %151 = vector.extract_strided_slice %44 {offsets = [0, 4], sizes = [1, 1], strides = [1, 1]} : vector<1x8xf32> to vector<1x1xf32>
    %152 = vector.extract_strided_slice %45 {offsets = [0, 4], sizes = [1, 1], strides = [1, 1]} : vector<1x8xf32> to vector<1x1xf32>
    %153 = vector.broadcast %151 : vector<1x1xf32> to vector<1x128xf32>
    %154 = arith.mulf %153, %150 : vector<1x128xf32>
    %155 = vector.broadcast %152 : vector<1x1xf32> to vector<1x128xf32>
    %156 = arith.mulf %155, %27 : vector<1x128xf32>
    %c1_i32_40 = arith.constant 1 : i32
    %157 = tpu.dynamic_rotate %150 by %c1_i32_40 dim 1 : vector<1x128xf32>, i32 -> vector<1x128xf32>
    %c127_i32_41 = arith.constant 127 : i32
    %158 = tpu.dynamic_rotate %150 by %c127_i32_41 dim 1 : vector<1x128xf32>, i32 -> vector<1x128xf32>
    %159 = arith.select %6, %157, %158 : vector<1x128xi1>, vector<1x128xf32>
    %160 = arith.mulf %156, %159 : vector<1x128xf32>
    %161 = arith.addf %154, %160 : vector<1x128xf32>
    %162 = vector.extract_strided_slice %44 {offsets = [0, 5], sizes = [1, 1], strides = [1, 1]} : vector<1x8xf32> to vector<1x1xf32>
    %163 = vector.extract_strided_slice %45 {offsets = [0, 5], sizes = [1, 1], strides = [1, 1]} : vector<1x8xf32> to vector<1x1xf32>
    %164 = vector.broadcast %162 : vector<1x1xf32> to vector<1x128xf32>
    %165 = arith.mulf %164, %161 : vector<1x128xf32>
    %166 = vector.broadcast %163 : vector<1x1xf32> to vector<1x128xf32>
    %167 = arith.mulf %166, %30 : vector<1x128xf32>
    %c2_i32_42 = arith.constant 2 : i32
    %168 = tpu.dynamic_rotate %161 by %c2_i32_42 dim 1 : vector<1x128xf32>, i32 -> vector<1x128xf32>
    %c126_i32_43 = arith.constant 126 : i32
    %169 = tpu.dynamic_rotate %161 by %c126_i32_43 dim 1 : vector<1x128xf32>, i32 -> vector<1x128xf32>
    %170 = arith.select %12, %168, %169 : vector<1x128xi1>, vector<1x128xf32>
    %171 = arith.mulf %167, %170 : vector<1x128xf32>
    %172 = arith.addf %165, %171 : vector<1x128xf32>
    %173 = vector.extract_strided_slice %44 {offsets = [0, 6], sizes = [1, 1], strides = [1, 1]} : vector<1x8xf32> to vector<1x1xf32>
    %174 = vector.extract_strided_slice %45 {offsets = [0, 6], sizes = [1, 1], strides = [1, 1]} : vector<1x8xf32> to vector<1x1xf32>
    %175 = vector.broadcast %173 : vector<1x1xf32> to vector<1x128xf32>
    %176 = arith.mulf %175, %172 : vector<1x128xf32>
    %177 = vector.broadcast %174 : vector<1x1xf32> to vector<1x128xf32>
    %178 = arith.mulf %177, %33 : vector<1x128xf32>
    %c4_i32_44 = arith.constant 4 : i32
    %179 = tpu.dynamic_rotate %172 by %c4_i32_44 dim 1 : vector<1x128xf32>, i32 -> vector<1x128xf32>
    %c124_i32_45 = arith.constant 124 : i32
    %180 = tpu.dynamic_rotate %172 by %c124_i32_45 dim 1 : vector<1x128xf32>, i32 -> vector<1x128xf32>
    %181 = arith.select %18, %179, %180 : vector<1x128xi1>, vector<1x128xf32>
    %182 = arith.mulf %178, %181 : vector<1x128xf32>
    %183 = arith.addf %176, %182 : vector<1x128xf32>
    %184 = vector.extract_strided_slice %44 {offsets = [0, 7], sizes = [1, 1], strides = [1, 1]} : vector<1x8xf32> to vector<1x1xf32>
    %185 = vector.extract_strided_slice %45 {offsets = [0, 7], sizes = [1, 1], strides = [1, 1]} : vector<1x8xf32> to vector<1x1xf32>
    %186 = vector.broadcast %184 : vector<1x1xf32> to vector<1x128xf32>
    %187 = arith.mulf %186, %183 : vector<1x128xf32>
    %188 = vector.broadcast %185 : vector<1x1xf32> to vector<1x128xf32>
    %189 = arith.mulf %188, %36 : vector<1x128xf32>
    %c8_i32_46 = arith.constant 8 : i32
    %190 = tpu.dynamic_rotate %183 by %c8_i32_46 dim 1 : vector<1x128xf32>, i32 -> vector<1x128xf32>
    %c120_i32_47 = arith.constant 120 : i32
    %191 = tpu.dynamic_rotate %183 by %c120_i32_47 dim 1 : vector<1x128xf32>, i32 -> vector<1x128xf32>
    %192 = arith.select %24, %190, %191 : vector<1x128xi1>, vector<1x128xf32>
    %193 = arith.mulf %189, %192 : vector<1x128xf32>
    %194 = arith.addf %187, %193 : vector<1x128xf32>
    %c2_i32_48 = arith.constant 2 : i32
    %195 = tpu.dynamic_rotate %194 by %c2_i32_48 dim 1 : vector<1x128xf32>, i32 -> vector<1x128xf32>
    %c126_i32_49 = arith.constant 126 : i32
    %196 = tpu.dynamic_rotate %194 by %c126_i32_49 dim 1 : vector<1x128xf32>, i32 -> vector<1x128xf32>
    %197 = arith.select %12, %195, %196 : vector<1x128xi1>, vector<1x128xf32>
    %198 = arith.select %6, %197, %194 : vector<1x128xi1>, vector<1x128xf32>
    %c4_i32_50 = arith.constant 4 : i32
    %199 = tpu.dynamic_rotate %198 by %c4_i32_50 dim 1 : vector<1x128xf32>, i32 -> vector<1x128xf32>
    %c124_i32_51 = arith.constant 124 : i32
    %200 = tpu.dynamic_rotate %198 by %c124_i32_51 dim 1 : vector<1x128xf32>, i32 -> vector<1x128xf32>
    %201 = arith.select %18, %199, %200 : vector<1x128xi1>, vector<1x128xf32>
    %202 = arith.select %12, %201, %198 : vector<1x128xi1>, vector<1x128xf32>
    %c8_i32_52 = arith.constant 8 : i32
    %203 = tpu.dynamic_rotate %202 by %c8_i32_52 dim 1 : vector<1x128xf32>, i32 -> vector<1x128xf32>
    %c120_i32_53 = arith.constant 120 : i32
    %204 = tpu.dynamic_rotate %202 by %c120_i32_53 dim 1 : vector<1x128xf32>, i32 -> vector<1x128xf32>
    %205 = arith.select %24, %203, %204 : vector<1x128xi1>, vector<1x128xf32>
    %206 = arith.select %18, %205, %202 : vector<1x128xi1>, vector<1x128xf32>
    %207 = vector.extract_strided_slice %206 {offsets = [0, 0], sizes = [1, 1], strides = [1, 1]} : vector<1x128xf32> to vector<1x1xf32>
    %208 = arith.mulf %207, %207 : vector<1x1xf32>
    %c0_54 = arith.constant 0 : index
    %c0_55 = arith.constant 0 : index
    %209 = vector.load %arg2[%c0_54, %c0_55] : memref<1x1xf32, #tpu.memory_space<vmem>>, vector<1x1xf32>
    tpu.vector_store %arg2[%c0_54, %c0_55], %208 {strides = array<i32>} : memref<1x1xf32, #tpu.memory_space<vmem>>, vector<1x1xf32>,
    return
  }
}

</mosaic_0001>

<llo_original>
// kernel: tpu_custom_call.1
$region0: #{tpu_custom_call.1}
  #allocation0 [shape = 'u32[]', space=smem, size = 0x4, offset = 0x4, fixed_abs, tag = 'smem constant byte address 0x4 - core index']
  #allocation1 [shape = 'u32[144,128]{1,0:T(1,128)}', space=vmem, size = 0x12000, scoped, tag = 'internal scratch']
  %s0 = inlined_call_operand.hbm [shape: f32[1,4], index: 0, kind: input, shape index: {}]
  %s1 = inlined_call_operand.vmem [shape: f32[1,8], index: 1, kind: input, shape index: {}]
  %s2 = inlined_call_operand.hbm [shape: f32[1,1], index: 2, kind: output, shape index: {}]
  %s3 = sld [smem:[#allocation0]]
  $region22: #{tpu_custom_call.1} parent=0
    _
  %s5 = ssub.s32 1, %s3
  %s6 = scalar_select 0, %s5, %s3
  $region1: #{tpu_custom_call.1} parent=0
    #allocation2 [shape = 'u8[512]{0}', space=vmem, size = 0x400, scoped, tag = 'input window, operand 0, single buffered']
    #allocation3 [shape = 's32[1]{0}', space=sflag, size = 0x4, scoped, tag = 'scoped memory for tpu_custom_call.1']
    #allocation4 [shape = 's32[1]{0}', space=sflag, size = 0x4, scoped, tag = 'scoped memory for tpu_custom_call.1']
    #allocation5 [shape = 'u8[512]{0}', space=vmem, size = 0x400, scoped, tag = 'output window, operand 0, single buffered']
    %7 = vsyncpa [#allocation3], 0
    %8 = vsyncpa [#allocation4], 0
    // Predicated region
    $region2: #{tpu_custom_call.1} parent=1 // pred_check
      _
    $region3: #{tpu_custom_call.1} parent=1 // pred_check_branch
      %10 = sbr.rel (0) target = $region5
    $region4: #{tpu_custom_call.1} parent=1 // pred_region
      %s12 = ssub.s32 16, 16
      %13 = vsyncadd [#allocation3], %s12
      %s15 = sshll.u32 [#allocation2], 4
      %s16 = int_to_ptr.vmem [resolvable:$true] %s15
      %18 = dma.hbm_to_vmem [thread:$0]  %s0, 16, %s16, [#allocation3]
    $region5: #{tpu_custom_call.1} parent=1 // pred_fallthru
      _
    // Predicated region
    $region6: #{tpu_custom_call.1} parent=1 // pred_check
      _
    $region7: #{tpu_custom_call.1} parent=1 // pred_check_branch
      %20 = sbr.rel (0) target = $region9
    $region8: #{tpu_custom_call.1} parent=1 // pred_region
      _
    $region9: #{tpu_custom_call.1} parent=1 // pred_fallthru
      _
    // Predicated region
    $region10: #{tpu_custom_call.1} parent=1 // pred_check
      _
    $region11: #{tpu_custom_call.1} parent=1 // pred_check_branch
      %22 = sbr.rel (0) target = $region13
    $region12: #{tpu_custom_call.1} parent=1 // pred_region
      %23 = dma.done [#allocation3], 16
    $region13: #{tpu_custom_call.1} parent=1 // pred_fallthru
      _
    %v24 = vlaneseq
    %v25 = vand.u32 %v24, 127
    %v26 = vand.u32 %v25, 1
    %vm27 = vcmp.eq.s32.totalorder %v26, 1
    %v28 = vshra.s32 %v25, 1
    %v29 = vand.u32 %v28, 1
    %vm30 = vcmp.eq.s32.totalorder %v29, 1
    %v31 = vshra.s32 %v25, 2
    %v32 = vand.u32 %v31, 1
    %vm33 = vcmp.eq.s32.totalorder %v32, 1
    %v34 = vshra.s32 %v25, 3
    %v35 = vand.u32 %v34, 1
    %vm36 = vcmp.eq.s32.totalorder %v35, 1
    %v37 = vsel %vm27, 1.0, -1.0
    %v38 = vsel %vm30, 1.0, -1.0
    %v39 = vsel %vm33, 1.0, -1.0
    %v40 = vsel %vm36, 1.0, -1.0
    %v41 = vld [vmem:[#allocation2] sm:$0x1]
    %v42 = vand.u32 2147483647, %v41
    %vm43 = vcmp.le.f32.partialorder %v42, 0.7853982
    %vm44 = vcmp.lt.s32.totalorder %v41, 0
    %v45 = vand.u32 %v41, 2139095040
    %v46 = vshrl.u32 %v45, 23
    %v47 = vsub.s32 %v46, 127
    %v48 = vand.u32 2147483647, %v41
    %v49 = vand.u32 %v48, 8388607
    %v50 = vor.u32 %v49, 8388608
    %v51 = vsub.s32 0, %v50
    %v52 = vadd.s32 %v47, 1
    %vm53 = vcmp.gt.s32.totalorder %v52, 0
    %v54 = vsel %vm53, %v52, 0
    %v55 = vshrl.u32 %v54, 5
    %v56 = vand.u32 %v54, 31
    %v57 = vsub.s32 32, %v56
    %v58 = vshrl.u32 683565275, %v57
    %v59 = vshll.u32 683565275, %v56
    %v60 = vshrl.u32 2475754826, %v57
    %v61 = vor.u32 %v59, %v60
    %v62 = vshll.u32 2475754826, %v56
    %v63 = vshrl.u32 2131351028, %v57
    %v64 = vor.u32 %v62, %v63
    %v65 = vshll.u32 2131351028, %v56
    %v66 = vshrl.u32 2102212464, %v57
    %v67 = vor.u32 %v65, %v66
    %v68 = vshll.u32 2102212464, %v56
    %v69 = vshrl.u32 920167782, %v57
    %v70 = vor.u32 %v68, %v69
    %v71 = vshll.u32 920167782, %v56
    %v72 = vshrl.u32 1326507024, %v57
    %v73 = vor.u32 %v71, %v72
    %vm74 = vcmp.lt.s32.totalorder %v55, 1
    %vm75 = vcmp.lt.s32.totalorder %v55, 2
    %vm76 = vcmp.lt.s32.totalorder %v55, 3
    %vm77 = vcmp.lt.s32.totalorder %v55, 4
    %v78 = vsel %vm74, %v58, %v61
    %v79 = vsel %vm77, %v67, 2102212464
    %v80 = vsel %vm76, %v64, %v79
    %v81 = vsel %vm75, %v78, %v80
    %v82 = vsel %vm74, %v61, %v64
    %v83 = vsel %vm77, %v70, 920167782
    %v84 = vsel %vm76, %v67, %v83
    %v85 = vsel %vm75, %v82, %v84
    %v86 = vsel %vm74, %v64, %v67
    %v87 = vsel %vm77, %v73, 1326507024
    %v88 = vsel %vm76, %v70, %v87
    %v89 = vsel %vm75, %v86, %v88
    %v90 = vshll.u32 %v50, 8
    %v91 = vmul.u32.u64.compose %v90, %v89
    %v92 = vextract.low.u32 %v91
    %v93 = vextract.high.u32 %v91
    %v94 = vmul.u32.u64.compose %v90, %v85
    %v95 = vextract.low.u32 %v94
    %v96 = vextract.high.u32 %v94
    %v97 = vmul.u32 %v90, %v81
    %v98 = vadd.s32 %v93, %v95
    %vm99 = vc.u32 %v93, %v95
    %v100 = vadd.s32 %v96, 1
    %v101 = vsel %vm99, %v100, %v96
    %v102 = vadd.s32 %v97, %v101
    %v103 = vadd.s32 %v102, 536870912
    %v104 = vshrl.u32 %v103, 30
    %v105 = vshll.u32 %v104, 30
    %v106 = vsub.s32 %v102, %v105
    %vm107 = vcmp.lt.s32.totalorder %v106, 0
    %v108 = vsub.s32 0, %v106
    %v109 = vsel %vm107, %v108, %v106
    %v110 = vclz %v109
    %v111 = vsub.s32 %v110, 2
    %vm112 = vcmp.gt.s32.totalorder 0, %v111
    %v113 = vsel %vm112, 0, %v111
    %v114 = vsub.s32 32, %v113
    %v115 = vshll.u32 %v106, %v113
    %v116 = vshrl.u32 %v98, %v114
    %v117 = vor.u32 %v115, %v116
    %v118 = vsub.s32 4294967266, %v113
    %v119 = vadd.s32 %v118, 127
    %v120 = vshll.u32 %v119, 23
    %v121 = vor.u32 4788187, %v120
    %v122 = vand.u32 2147483647, %v121
    %v124 = vcvt.s32.f32 %v117
    %v125 = vmul.f32 %v124, %v122
    %v126 = vxor.u32 %v125, 2147483648
    %v127 = vsel %vm44, %v126, %v125
    %v128 = vsub.s32 4, %v104
    %v129 = vsel %vm44, %v128, %v104
    %v130 = vsel %vm43, %v41, %v127
    %v131 = vsel %vm43, 0, %v129
    %v132 = vcosq.f32.pop %v130
    %v133 = vsinq.f32.pop %v130
    %vm134 = vweird.f32 %v41
    %v135 = vand.u32 %v131, 3
    %vm136 = vcmp.lt.s32.totalorder %v135, 2
    %vm137 = vcmp.eq.s32.totalorder %v135, 0
    %v138 = vxor.u32 %v133, 2147483648
    %v139 = vsel %vm137, %v132, %v138
    %vm140 = vcmp.eq.s32.totalorder %v135, 2
    %v141 = vxor.u32 %v132, 2147483648
    %v142 = vsel %vm140, %v141, %v133
    %v143 = vsel %vm136, %v139, %v142
    %v144 = vsel %vm134, nan, %v143
    %v145 = vand.u32 2147483647, %v41
    %vm146 = vcmp.le.f32.partialorder %v145, 0.7853982
    %vm147 = vcmp.lt.s32.totalorder %v41, 0
    %v148 = vand.u32 %v41, 2139095040
    %v149 = vshrl.u32 %v148, 23
    %v150 = vsub.s32 %v149, 127
    %v151 = vand.u32 2147483647, %v41
    %v152 = vand.u32 %v151, 8388607
    %v153 = vor.u32 %v152, 8388608
    %v154 = vsub.s32 0, %v153
    %v155 = vadd.s32 %v150, 1
    %vm156 = vcmp.gt.s32.totalorder %v155, 0
    %v157 = vsel %vm156, %v155, 0
    %v158 = vshrl.u32 %v157, 5
    %v159 = vand.u32 %v157, 31
    %v160 = vsub.s32 32, %v159
    %v161 = vshrl.u32 683565275, %v160
    %v162 = vshll.u32 683565275, %v159
    %v163 = vshrl.u32 2475754826, %v160
    %v164 = vor.u32 %v162, %v163
    %v165 = vshll.u32 2475754826, %v159
    %v166 = vshrl.u32 2131351028, %v160
    %v167 = vor.u32 %v165, %v166
    %v168 = vshll.u32 2131351028, %v159
    %v169 = vshrl.u32 2102212464, %v160
    %v170 = vor.u32 %v168, %v169
    %v171 = vshll.u32 2102212464, %v159
    %v172 = vshrl.u32 920167782, %v160
    %v173 = vor.u32 %v171, %v172
    %v174 = vshll.u32 920167782, %v159
    %v175 = vshrl.u32 1326507024, %v160
    %v176 = vor.u32 %v174, %v175
    %vm177 = vcmp.lt.s32.totalorder %v158, 1
    %vm178 = vcmp.lt.s32.totalorder %v158, 2
    %vm179 = vcmp.lt.s32.totalorder %v158, 3
    %vm180 = vcmp.lt.s32.totalorder %v158, 4
    %v181 = vsel %vm177, %v161, %v164
    %v182 = vsel %vm180, %v170, 2102212464
    %v183 = vsel %vm179, %v167, %v182
    %v184 = vsel %vm178, %v181, %v183
    %v185 = vsel %vm177, %v164, %v167
    %v186 = vsel %vm180, %v173, 920167782
    %v187 = vsel %vm179, %v170, %v186
    %v188 = vsel %vm178, %v185, %v187
    %v189 = vsel %vm177, %v167, %v170
    %v190 = vsel %vm180, %v176, 1326507024
    %v191 = vsel %vm179, %v173, %v190
    %v192 = vsel %vm178, %v189, %v191
    %v193 = vshll.u32 %v153, 8
    %v194 = vmul.u32.u64.compose %v193, %v192
    %v195 = vextract.low.u32 %v194
    %v196 = vextract.high.u32 %v194
    %v197 = vmul.u32.u64.compose %v193, %v188
    %v198 = vextract.low.u32 %v197
    %v199 = vextract.high.u32 %v197
    %v200 = vmul.u32 %v193, %v184
    %v201 = vadd.s32 %v196, %v198
    %vm202 = vc.u32 %v196, %v198
    %v203 = vadd.s32 %v199, 1
    %v204 = vsel %vm202, %v203, %v199
    %v205 = vadd.s32 %v200, %v204
    %v206 = vadd.s32 %v205, 536870912
    %v207 = vshrl.u32 %v206, 30
    %v208 = vshll.u32 %v207, 30
    %v209 = vsub.s32 %v205, %v208
    %vm210 = vcmp.lt.s32.totalorder %v209, 0
    %v211 = vsub.s32 0, %v209
    %v212 = vsel %vm210, %v211, %v209
    %v213 = vclz %v212
    %v214 = vsub.s32 %v213, 2
    %vm215 = vcmp.gt.s32.totalorder 0, %v214
    %v216 = vsel %vm215, 0, %v214
    %v217 = vsub.s32 32, %v216
    %v218 = vshll.u32 %v209, %v216
    %v219 = vshrl.u32 %v201, %v217
    %v220 = vor.u32 %v218, %v219
    %v221 = vsub.s32 4294967266, %v216
    %v222 = vadd.s32 %v221, 127
    %v223 = vshll.u32 %v222, 23
    %v224 = vor.u32 4788187, %v223
    %v225 = vand.u32 2147483647, %v224
    %v227 = vcvt.s32.f32 %v220
    %v228 = vmul.f32 %v227, %v225
    %v229 = vxor.u32 %v228, 2147483648
    %v230 = vsel %vm147, %v229, %v228
    %v231 = vsub.s32 4, %v207
    %v232 = vsel %vm147, %v231, %v207
    %v233 = vsel %vm146, %v41, %v230
    %v234 = vsel %vm146, 0, %v232
    %v235 = vcosq.f32.pop %v233
    %v236 = vsinq.f32.pop %v233
    %vm237 = vweird.f32 %v41
    %v238 = vadd.s32 %v234, 3
    %v239 = vand.u32 %v238, 3
    %vm240 = vcmp.lt.s32.totalorder %v239, 2
    %vm241 = vcmp.eq.s32.totalorder %v239, 0
    %v242 = vxor.u32 %v236, 2147483648
    %v243 = vsel %vm241, %v235, %v242
    %vm244 = vcmp.eq.s32.totalorder %v239, 2
    %v245 = vxor.u32 %v235, 2147483648
    %v246 = vsel %vm244, %v245, %v236
    %v247 = vsel %vm240, %v243, %v246
    %v248 = vsel %vm237, nan, %v247
    %v249 = vld [vmem:[%s1] sm:$0x1]
    %v250 = vmul.f32 %v249, 0.5
    %v251 = vand.u32 2147483647, %v250
    %vm252 = vcmp.le.f32.partialorder %v251, 0.7853982
    %vm253 = vcmp.lt.s32.totalorder %v250, 0
    %v254 = vand.u32 %v250, 2139095040
    %v255 = vshrl.u32 %v254, 23
    %v256 = vsub.s32 %v255, 127
    %v257 = vand.u32 2147483647, %v250
    %v258 = vand.u32 %v257, 8388607
    %v259 = vor.u32 %v258, 8388608
    %v260 = vsub.s32 0, %v259
    %v261 = vadd.s32 %v256, 1
    %vm262 = vcmp.gt.s32.totalorder %v261, 0
    %v263 = vsel %vm262, %v261, 0
    %v264 = vshrl.u32 %v263, 5
    %v265 = vand.u32 %v263, 31
    %v266 = vsub.s32 32, %v265
    %v267 = vshrl.u32 683565275, %v266
    %v268 = vshll.u32 683565275, %v265
    %v269 = vshrl.u32 2475754826, %v266
    %v270 = vor.u32 %v268, %v269
    %v271 = vshll.u32 2475754826, %v265
    %v272 = vshrl.u32 2131351028, %v266
    %v273 = vor.u32 %v271, %v272
    %v274 = vshll.u32 2131351028, %v265
    %v275 = vshrl.u32 2102212464, %v266
    %v276 = vor.u32 %v274, %v275
    %v277 = vshll.u32 2102212464, %v265
    %v278 = vshrl.u32 920167782, %v266
    %v279 = vor.u32 %v277, %v278
    %v280 = vshll.u32 920167782, %v265
    %v281 = vshrl.u32 1326507024, %v266
    %v282 = vor.u32 %v280, %v281
    %vm283 = vcmp.lt.s32.totalorder %v264, 1
    %vm284 = vcmp.lt.s32.totalorder %v264, 2
    %vm285 = vcmp.lt.s32.totalorder %v264, 3
    %vm286 = vcmp.lt.s32.totalorder %v264, 4
    %v287 = vsel %vm283, %v267, %v270
    %v288 = vsel %vm286, %v276, 2102212464
    %v289 = vsel %vm285, %v273, %v288
    %v290 = vsel %vm284, %v287, %v289
    %v291 = vsel %vm283, %v270, %v273
    %v292 = vsel %vm286, %v279, 920167782
    %v293 = vsel %vm285, %v276, %v292
    %v294 = vsel %vm284, %v291, %v293
    %v295 = vsel %vm283, %v273, %v276
    %v296 = vsel %vm286, %v282, 1326507024
    %v297 = vsel %vm285, %v279, %v296
    %v298 = vsel %vm284, %v295, %v297
    %v299 = vshll.u32 %v259, 8
    %v300 = vmul.u32.u64.compose %v299, %v298
    %v301 = vextract.low.u32 %v300
    %v302 = vextract.high.u32 %v300
    %v303 = vmul.u32.u64.compose %v299, %v294
    %v304 = vextract.low.u32 %v303
    %v305 = vextract.high.u32 %v303
    %v306 = vmul.u32 %v299, %v290
    %v307 = vadd.s32 %v302, %v304
    %vm308 = vc.u32 %v302, %v304
    %v309 = vadd.s32 %v305, 1
    %v310 = vsel %vm308, %v309, %v305
    %v311 = vadd.s32 %v306, %v310
    %v312 = vadd.s32 %v311, 536870912
    %v313 = vshrl.u32 %v312, 30
    %v314 = vshll.u32 %v313, 30
    %v315 = vsub.s32 %v311, %v314
    %vm316 = vcmp.lt.s32.totalorder %v315, 0
    %v317 = vsub.s32 0, %v315
    %v318 = vsel %vm316, %v317, %v315
    %v319 = vclz %v318
    %v320 = vsub.s32 %v319, 2
    %vm321 = vcmp.gt.s32.totalorder 0, %v320
    %v322 = vsel %vm321, 0, %v320
    %v323 = vsub.s32 32, %v322
    %v324 = vshll.u32 %v315, %v322
    %v325 = vshrl.u32 %v307, %v323
    %v326 = vor.u32 %v324, %v325
    %v327 = vsub.s32 4294967266, %v322
    %v328 = vadd.s32 %v327, 127
    %v329 = vshll.u32 %v328, 23
    %v330 = vor.u32 4788187, %v329
    %v331 = vand.u32 2147483647, %v330
    %v333 = vcvt.s32.f32 %v326
    %v334 = vmul.f32 %v333, %v331
    %v335 = vxor.u32 %v334, 2147483648
    %v336 = vsel %vm253, %v335, %v334
    %v337 = vsub.s32 4, %v313
    %v338 = vsel %vm253, %v337, %v313
    %v339 = vsel %vm252, %v250, %v336
    %v340 = vsel %vm252, 0, %v338
    %v341 = vcosq.f32.pop %v339
    %v342 = vsinq.f32.pop %v339
    %vm343 = vweird.f32 %v250
    %v344 = vand.u32 %v340, 3
    %vm345 = vcmp.lt.s32.totalorder %v344, 2
    %vm346 = vcmp.eq.s32.totalorder %v344, 0
    %v347 = vxor.u32 %v342, 2147483648
    %v348 = vsel %vm346, %v341, %v347
    %vm349 = vcmp.eq.s32.totalorder %v344, 2
    %v350 = vxor.u32 %v341, 2147483648
    %v351 = vsel %vm349, %v350, %v342
    %v352 = vsel %vm345, %v348, %v351
    %v353 = vsel %vm343, nan, %v352
    %v354 = vand.u32 2147483647, %v250
    %vm355 = vcmp.le.f32.partialorder %v354, 0.7853982
    %vm356 = vcmp.lt.s32.totalorder %v250, 0
    %v357 = vand.u32 %v250, 2139095040
    %v358 = vshrl.u32 %v357, 23
    %v359 = vsub.s32 %v358, 127
    %v360 = vand.u32 2147483647, %v250
    %v361 = vand.u32 %v360, 8388607
    %v362 = vor.u32 %v361, 8388608
    %v363 = vsub.s32 0, %v362
    %v364 = vadd.s32 %v359, 1
    %vm365 = vcmp.gt.s32.totalorder %v364, 0
    %v366 = vsel %vm365, %v364, 0
    %v367 = vshrl.u32 %v366, 5
    %v368 = vand.u32 %v366, 31
    %v369 = vsub.s32 32, %v368
    %v370 = vshrl.u32 683565275, %v369
    %v371 = vshll.u32 683565275, %v368
    %v372 = vshrl.u32 2475754826, %v369
    %v373 = vor.u32 %v371, %v372
    %v374 = vshll.u32 2475754826, %v368
    %v375 = vshrl.u32 2131351028, %v369
    %v376 = vor.u32 %v374, %v375
    %v377 = vshll.u32 2131351028, %v368
    %v378 = vshrl.u32 2102212464, %v369
    %v379 = vor.u32 %v377, %v378
    %v380 = vshll.u32 2102212464, %v368
    %v381 = vshrl.u32 920167782, %v369
    %v382 = vor.u32 %v380, %v381
    %v383 = vshll.u32 920167782, %v368
    %v384 = vshrl.u32 1326507024, %v369
    %v385 = vor.u32 %v383, %v384
    %vm386 = vcmp.lt.s32.totalorder %v367, 1
    %vm387 = vcmp.lt.s32.totalorder %v367, 2
    %vm388 = vcmp.lt.s32.totalorder %v367, 3
    %vm389 = vcmp.lt.s32.totalorder %v367, 4
    %v390 = vsel %vm386, %v370, %v373
    %v391 = vsel %vm389, %v379, 2102212464
    %v392 = vsel %vm388, %v376, %v391
    %v393 = vsel %vm387, %v390, %v392
    %v394 = vsel %vm386, %v373, %v376
    %v395 = vsel %vm389, %v382, 920167782
    %v396 = vsel %vm388, %v379, %v395
    %v397 = vsel %vm387, %v394, %v396
    %v398 = vsel %vm386, %v376, %v379
    %v399 = vsel %vm389, %v385, 1326507024
    %v400 = vsel %vm388, %v382, %v399
    %v401 = vsel %vm387, %v398, %v400
    %v402 = vshll.u32 %v362, 8
    %v403 = vmul.u32.u64.compose %v402, %v401
    %v404 = vextract.low.u32 %v403
    %v405 = vextract.high.u32 %v403
    %v406 = vmul.u32.u64.compose %v402, %v397
    %v407 = vextract.low.u32 %v406
    %v408 = vextract.high.u32 %v406
    %v409 = vmul.u32 %v402, %v393
    %v410 = vadd.s32 %v405, %v407
    %vm411 = vc.u32 %v405, %v407
    %v412 = vadd.s32 %v408, 1
    %v413 = vsel %vm411, %v412, %v408
    %v414 = vadd.s32 %v409, %v413
    %v415 = vadd.s32 %v414, 536870912
    %v416 = vshrl.u32 %v415, 30
    %v417 = vshll.u32 %v416, 30
    %v418 = vsub.s32 %v414, %v417
    %vm419 = vcmp.lt.s32.totalorder %v418, 0
    %v420 = vsub.s32 0, %v418
    %v421 = vsel %vm419, %v420, %v418
    %v422 = vclz %v421
    %v423 = vsub.s32 %v422, 2
    %vm424 = vcmp.gt.s32.totalorder 0, %v423
    %v425 = vsel %vm424, 0, %v423
    %v426 = vsub.s32 32, %v425
    %v427 = vshll.u32 %v418, %v425
    %v428 = vshrl.u32 %v410, %v426
    %v429 = vor.u32 %v427, %v428
    %v430 = vsub.s32 4294967266, %v425
    %v431 = vadd.s32 %v430, 127
    %v432 = vshll.u32 %v431, 23
    %v433 = vor.u32 4788187, %v432
    %v434 = vand.u32 2147483647, %v433
    %v436 = vcvt.s32.f32 %v429
    %v437 = vmul.f32 %v436, %v434
    %v438 = vxor.u32 %v437, 2147483648
    %v439 = vsel %vm356, %v438, %v437
    %v440 = vsub.s32 4, %v416
    %v441 = vsel %vm356, %v440, %v416
    %v442 = vsel %vm355, %v250, %v439
    %v443 = vsel %vm355, 0, %v441
    %v444 = vcosq.f32.pop %v442
    %v445 = vsinq.f32.pop %v442
    %vm446 = vweird.f32 %v250
    %v447 = vadd.s32 %v443, 3
    %v448 = vand.u32 %v447, 3
    %vm449 = vcmp.lt.s32.totalorder %v448, 2
    %vm450 = vcmp.eq.s32.totalorder %v448, 0
    %v451 = vxor.u32 %v445, 2147483648
    %v452 = vsel %vm450, %v444, %v451
    %vm453 = vcmp.eq.s32.totalorder %v448, 2
    %v454 = vxor.u32 %v444, 2147483648
    %v455 = vsel %vm453, %v454, %v445
    %v456 = vsel %vm449, %v452, %v455
    %v457 = vsel %vm446, nan, %v456
    %vm458 = vcmp.eq.s32.totalorder %v25, 0
    %v459 = vsel %vm458, 1.0, 0.0
    %461 = vset.pattern.permute.xlu0 0
    %462 = vperm.xlu0 %461, %v144
    %v463 = vpop.permute.xlu0 %462
    %v465 = vlaneseq
    %v466 = vshrl.u32 %v465, 7
    %v467 = vsub.s32 0, %v466
    %v468 = vrot.slane %v463, %v467
    %v469 = vmul.f32 %v468, %v459
    %471 = vset.pattern.permute.xlu0 0
    %472 = vperm.xlu0 %471, %v248
    %v473 = vpop.permute.xlu0 %472
    %v475 = vlaneseq
    %v476 = vshrl.u32 %v475, 7
    %v477 = vsub.s32 0, %v476
    %v478 = vrot.slane %v473, %v477
    %v479 = vmul.f32 %v478, %v37
    %480 = vrot.lane.b32.xlu0 %v459, 1
    %v481 = vpop.permute.xlu0 %480
    %482 = vrot.lane.b32.xlu0 %v459, 127
    %v483 = vpop.permute.xlu0 %482
    %v484 = vsel %vm27, %v481, %v483
    %v485 = vmul.f32 %v479, %v484
    %v486 = vadd.f32 %v469, %v485
    %487 = vset.pattern.permute.xlu0 1
    %488 = vperm.xlu0 %487, %v144
    %v489 = vpop.permute.xlu0 %488
    %v491 = vlaneseq
    %v492 = vshrl.u32 %v491, 7
    %v493 = vsub.s32 0, %v492
    %v494 = vrot.slane %v489, %v493
    %v495 = vmul.f32 %v494, %v486
    %496 = vset.pattern.permute.xlu0 1
    %497 = vperm.xlu0 %496, %v248
    %v498 = vpop.permute.xlu0 %497
    %v500 = vlaneseq
    %v501 = vshrl.u32 %v500, 7
    %v502 = vsub.s32 0, %v501
    %v503 = vrot.slane %v498, %v502
    %v504 = vmul.f32 %v503, %v38
    %505 = vrot.lane.b32.xlu0 %v486, 2
    %v506 = vpop.permute.xlu0 %505
    %507 = vrot.lane.b32.xlu0 %v486, 126
    %v508 = vpop.permute.xlu0 %507
    %v509 = vsel %vm30, %v506, %v508
    %v510 = vmul.f32 %v504, %v509
    %v511 = vadd.f32 %v495, %v510
    %512 = vset.pattern.permute.xlu0 2
    %513 = vperm.xlu0 %512, %v144
    %v514 = vpop.permute.xlu0 %513
    %v516 = vlaneseq
    %v517 = vshrl.u32 %v516, 7
    %v518 = vsub.s32 0, %v517
    %v519 = vrot.slane %v514, %v518
    %v520 = vmul.f32 %v519, %v511
    %521 = vset.pattern.permute.xlu0 2
    %522 = vperm.xlu0 %521, %v248
    %v523 = vpop.permute.xlu0 %522
    %v525 = vlaneseq
    %v526 = vshrl.u32 %v525, 7
    %v527 = vsub.s32 0, %v526
    %v528 = vrot.slane %v523, %v527
    %v529 = vmul.f32 %v528, %v39
    %530 = vrot.lane.b32.xlu0 %v511, 4
    %v531 = vpop.permute.xlu0 %530
    %532 = vrot.lane.b32.xlu0 %v511, 124
    %v533 = vpop.permute.xlu0 %532
    %v534 = vsel %vm33, %v531, %v533
    %v535 = vmul.f32 %v529, %v534
    %v536 = vadd.f32 %v520, %v535
    %537 = vset.pattern.permute.xlu0 3
    %538 = vperm.xlu0 %537, %v144
    %v539 = vpop.permute.xlu0 %538
    %v541 = vlaneseq
    %v542 = vshrl.u32 %v541, 7
    %v543 = vsub.s32 0, %v542
    %v544 = vrot.slane %v539, %v543
    %v545 = vmul.f32 %v544, %v536
    %546 = vset.pattern.permute.xlu0 3
    %547 = vperm.xlu0 %546, %v248
    %v548 = vpop.permute.xlu0 %547
    %v550 = vlaneseq
    %v551 = vshrl.u32 %v550, 7
    %v552 = vsub.s32 0, %v551
    %v553 = vrot.slane %v548, %v552
    %v554 = vmul.f32 %v553, %v40
    %555 = vrot.lane.b32.xlu0 %v536, 8
    %v556 = vpop.permute.xlu0 %555
    %557 = vrot.lane.b32.xlu0 %v536, 120
    %v558 = vpop.permute.xlu0 %557
    %v559 = vsel %vm36, %v556, %v558
    %v560 = vmul.f32 %v554, %v559
    %v561 = vadd.f32 %v545, %v560
    %563 = vset.pattern.permute.xlu0 0
    %564 = vperm.xlu0 %563, %v353
    %v565 = vpop.permute.xlu0 %564
    %v567 = vlaneseq
    %v568 = vshrl.u32 %v567, 7
    %v569 = vsub.s32 0, %v568
    %v570 = vrot.slane %v565, %v569
    %v571 = vmul.f32 %v570, %v561
    %573 = vset.pattern.permute.xlu0 0
    %574 = vperm.xlu0 %573, %v457
    %v575 = vpop.permute.xlu0 %574
    %v577 = vlaneseq
    %v578 = vshrl.u32 %v577, 7
    %v579 = vsub.s32 0, %v578
    %v580 = vrot.slane %v575, %v579
    %v581 = vmul.f32 %v580, %v37
    %582 = vrot.lane.b32.xlu0 %v561, 1
    %v583 = vpop.permute.xlu0 %582
    %584 = vrot.lane.b32.xlu0 %v561, 127
    %v585 = vpop.permute.xlu0 %584
    %v586 = vsel %vm27, %v583, %v585
    %v587 = vmul.f32 %v581, %v586
    %v588 = vadd.f32 %v571, %v587
    %589 = vset.pattern.permute.xlu0 1
    %590 = vperm.xlu0 %589, %v353
    %v591 = vpop.permute.xlu0 %590
    %v593 = vlaneseq
    %v594 = vshrl.u32 %v593, 7
    %v595 = vsub.s32 0, %v594
    %v596 = vrot.slane %v591, %v595
    %v597 = vmul.f32 %v596, %v588
    %598 = vset.pattern.permute.xlu0 1
    %599 = vperm.xlu0 %598, %v457
    %v600 = vpop.permute.xlu0 %599
    %v602 = vlaneseq
    %v603 = vshrl.u32 %v602, 7
    %v604 = vsub.s32 0, %v603
    %v605 = vrot.slane %v600, %v604
    %v606 = vmul.f32 %v605, %v38
    %607 = vrot.lane.b32.xlu0 %v588, 2
    %v608 = vpop.permute.xlu0 %607
    %609 = vrot.lane.b32.xlu0 %v588, 126
    %v610 = vpop.permute.xlu0 %609
    %v611 = vsel %vm30, %v608, %v610
    %v612 = vmul.f32 %v606, %v611
    %v613 = vadd.f32 %v597, %v612
    %614 = vset.pattern.permute.xlu0 2
    %615 = vperm.xlu0 %614, %v353
    %v616 = vpop.permute.xlu0 %615
    %v618 = vlaneseq
    %v619 = vshrl.u32 %v618, 7
    %v620 = vsub.s32 0, %v619
    %v621 = vrot.slane %v616, %v620
    %v622 = vmul.f32 %v621, %v613
    %623 = vset.pattern.permute.xlu0 2
    %624 = vperm.xlu0 %623, %v457
    %v625 = vpop.permute.xlu0 %624
    %v627 = vlaneseq
    %v628 = vshrl.u32 %v627, 7
    %v629 = vsub.s32 0, %v628
    %v630 = vrot.slane %v625, %v629
    %v631 = vmul.f32 %v630, %v39
    %632 = vrot.lane.b32.xlu0 %v613, 4
    %v633 = vpop.permute.xlu0 %632
    %634 = vrot.lane.b32.xlu0 %v613, 124
    %v635 = vpop.permute.xlu0 %634
    %v636 = vsel %vm33, %v633, %v635
    %v637 = vmul.f32 %v631, %v636
    %v638 = vadd.f32 %v622, %v637
    %639 = vset.pattern.permute.xlu0 3
    %640 = vperm.xlu0 %639, %v353
    %v641 = vpop.permute.xlu0 %640
    %v643 = vlaneseq
    %v644 = vshrl.u32 %v643, 7
    %v645 = vsub.s32 0, %v644
    %v646 = vrot.slane %v641, %v645
    %v647 = vmul.f32 %v646, %v638
    %648 = vset.pattern.permute.xlu0 3
    %649 = vperm.xlu0 %648, %v457
    %v650 = vpop.permute.xlu0 %649
    %v652 = vlaneseq
    %v653 = vshrl.u32 %v652, 7
    %v654 = vsub.s32 0, %v653
    %v655 = vrot.slane %v650, %v654
    %v656 = vmul.f32 %v655, %v40
    %657 = vrot.lane.b32.xlu0 %v638, 8
    %v658 = vpop.permute.xlu0 %657
    %659 = vrot.lane.b32.xlu0 %v638, 120
    %v660 = vpop.permute.xlu0 %659
    %v661 = vsel %vm36, %v658, %v660
    %v662 = vmul.f32 %v656, %v661
    %v663 = vadd.f32 %v647, %v662
    %664 = vrot.lane.b32.xlu0 %v663, 2
    %v665 = vpop.permute.xlu0 %664
    %666 = vrot.lane.b32.xlu0 %v663, 126
    %v667 = vpop.permute.xlu0 %666
    %v668 = vsel %vm30, %v665, %v667
    %v669 = vsel %vm27, %v668, %v663
    %670 = vrot.lane.b32.xlu0 %v669, 4
    %v671 = vpop.permute.xlu0 %670
    %672 = vrot.lane.b32.xlu0 %v669, 124
    %v673 = vpop.permute.xlu0 %672
    %v674 = vsel %vm33, %v671, %v673
    %v675 = vsel %vm30, %v674, %v669
    %676 = vrot.lane.b32.xlu0 %v675, 8
    %v677 = vpop.permute.xlu0 %676
    %678 = vrot.lane.b32.xlu0 %v675, 120
    %v679 = vpop.permute.xlu0 %678
    %v680 = vsel %vm36, %v677, %v679
    %v681 = vsel %vm33, %v680, %v675
    %682 = vset.pattern.permute.xlu0 4
    %683 = vperm.xlu0 %682, %v353
    %v684 = vpop.permute.xlu0 %683
    %v686 = vlaneseq
    %v687 = vshrl.u32 %v686, 7
    %v688 = vsub.s32 0, %v687
    %v689 = vrot.slane %v684, %v688
    %v690 = vmul.f32 %v689, %v681
    %691 = vset.pattern.permute.xlu0 4
    %692 = vperm.xlu0 %691, %v457
    %v693 = vpop.permute.xlu0 %692
    %v695 = vlaneseq
    %v696 = vshrl.u32 %v695, 7
    %v697 = vsub.s32 0, %v696
    %v698 = vrot.slane %v693, %v697
    %v699 = vmul.f32 %v698, %v37
    %700 = vrot.lane.b32.xlu0 %v681, 1
    %v701 = vpop.permute.xlu0 %700
    %702 = vrot.lane.b32.xlu0 %v681, 127
    %v703 = vpop.permute.xlu0 %702
    %v704 = vsel %vm27, %v701, %v703
    %v705 = vmul.f32 %v699, %v704
    %v706 = vadd.f32 %v690, %v705
    %707 = vset.pattern.permute.xlu0 5
    %708 = vperm.xlu0 %707, %v353
    %v709 = vpop.permute.xlu0 %708
    %v711 = vlaneseq
    %v712 = vshrl.u32 %v711, 7
    %v713 = vsub.s32 0, %v712
    %v714 = vrot.slane %v709, %v713
    %v715 = vmul.f32 %v714, %v706
    %716 = vset.pattern.permute.xlu0 5
    %717 = vperm.xlu0 %716, %v457
    %v718 = vpop.permute.xlu0 %717
    %v720 = vlaneseq
    %v721 = vshrl.u32 %v720, 7
    %v722 = vsub.s32 0, %v721
    %v723 = vrot.slane %v718, %v722
    %v724 = vmul.f32 %v723, %v38
    %725 = vrot.lane.b32.xlu0 %v706, 2
    %v726 = vpop.permute.xlu0 %725
    %727 = vrot.lane.b32.xlu0 %v706, 126
    %v728 = vpop.permute.xlu0 %727
    %v729 = vsel %vm30, %v726, %v728
    %v730 = vmul.f32 %v724, %v729
    %v731 = vadd.f32 %v715, %v730
    %732 = vset.pattern.permute.xlu0 6
    %733 = vperm.xlu0 %732, %v353
    %v734 = vpop.permute.xlu0 %733
    %v736 = vlaneseq
    %v737 = vshrl.u32 %v736, 7
    %v738 = vsub.s32 0, %v737
    %v739 = vrot.slane %v734, %v738
    %v740 = vmul.f32 %v739, %v731
    %741 = vset.pattern.permute.xlu0 6
    %742 = vperm.xlu0 %741, %v457
    %v743 = vpop.permute.xlu0 %742
    %v745 = vlaneseq
    %v746 = vshrl.u32 %v745, 7
    %v747 = vsub.s32 0, %v746
    %v748 = vrot.slane %v743, %v747
    %v749 = vmul.f32 %v748, %v39
    %750 = vrot.lane.b32.xlu0 %v731, 4
    %v751 = vpop.permute.xlu0 %750
    %752 = vrot.lane.b32.xlu0 %v731, 124
    %v753 = vpop.permute.xlu0 %752
    %v754 = vsel %vm33, %v751, %v753
    %v755 = vmul.f32 %v749, %v754
    %v756 = vadd.f32 %v740, %v755
    %757 = vset.pattern.permute.xlu0 7
    %758 = vperm.xlu0 %757, %v353
    %v759 = vpop.permute.xlu0 %758
    %v761 = vlaneseq
    %v762 = vshrl.u32 %v761, 7
    %v763 = vsub.s32 0, %v762
    %v764 = vrot.slane %v759, %v763
    %v765 = vmul.f32 %v764, %v756
    %766 = vset.pattern.permute.xlu0 7
    %767 = vperm.xlu0 %766, %v457
    %v768 = vpop.permute.xlu0 %767
    %v770 = vlaneseq
    %v771 = vshrl.u32 %v770, 7
    %v772 = vsub.s32 0, %v771
    %v773 = vrot.slane %v768, %v772
    %v774 = vmul.f32 %v773, %v40
    %775 = vrot.lane.b32.xlu0 %v756, 8
    %v776 = vpop.permute.xlu0 %775
    %777 = vrot.lane.b32.xlu0 %v756, 120
    %v778 = vpop.permute.xlu0 %777
    %v779 = vsel %vm36, %v776, %v778
    %v780 = vmul.f32 %v774, %v779
    %v781 = vadd.f32 %v765, %v780
    %782 = vrot.lane.b32.xlu0 %v781, 2
    %v783 = vpop.permute.xlu0 %782
    %784 = vrot.lane.b32.xlu0 %v781, 126
    %v785 = vpop.permute.xlu0 %784
    %v786 = vsel %vm30, %v783, %v785
    %v787 = vsel %vm27, %v786, %v781
    %788 = vrot.lane.b32.xlu0 %v787, 4
    %v789 = vpop.permute.xlu0 %788
    %790 = vrot.lane.b32.xlu0 %v787, 124
    %v791 = vpop.permute.xlu0 %790
    %v792 = vsel %vm33, %v789, %v791
    %v793 = vsel %vm30, %v792, %v787
    %794 = vrot.lane.b32.xlu0 %v793, 8
    %v795 = vpop.permute.xlu0 %794
    %796 = vrot.lane.b32.xlu0 %v793, 120
    %v797 = vpop.permute.xlu0 %796
    %v798 = vsel %vm36, %v795, %v797
    %v799 = vsel %vm33, %v798, %v793
    %v800 = vmul.f32 %v799, %v799
    %vm801 = vcmask 0
    %802 = vst.msk [vmem:[#allocation5] sm:$0x1] %vm801, %v800
    // Predicated region
    $region14: #{tpu_custom_call.1} parent=1 // pred_check
      _
    $region15: #{tpu_custom_call.1} parent=1 // pred_check_branch
      %804 = sbr.rel (0) target = $region17
    $region16: #{tpu_custom_call.1} parent=1 // pred_region
      %s806 = ssub.s32 16, 16
      %807 = vsyncadd [#allocation4], %s806
      %s809 = sshll.u32 [#allocation5], 4
      %s810 = int_to_ptr.vmem [resolvable:$true] %s809
      %812 = dma.vmem_to_hbm [thread:$0]  %s810, 16, %s2, [#allocation4]
    $region17: #{tpu_custom_call.1} parent=1 // pred_fallthru
      _
    // Predicated region
    $region18: #{tpu_custom_call.1} parent=1 // pred_check
      _
    $region19: #{tpu_custom_call.1} parent=1 // pred_check_branch
      %814 = sbr.rel (0) target = $region21
    $region20: #{tpu_custom_call.1} parent=1 // pred_region
      %815 = dma.done [#allocation4], 16
    $region21: #{tpu_custom_call.1} parent=1 // pred_fallthru
      _
    %816 = vsyncpa [#allocation3], 1
    %817 = vsyncpa [#allocation4], 1

</llo_original>
